<compile_context>
chip_gen: v5e
topology: v5e:2x2
jax: 0.10.0
libtpu: 0.0.40
codegen_flags: <defaults>
</compile_context>

<pallas_src>
import functools
import math

import jax
import jax.numpy as jnp
import numpy as np
from jax.experimental import pallas as pl
from jax.experimental.pallas import tpu as pltpu


def _pick_tile(n, candidates):
    """Largest candidate that divides n, else the full axis (full-dim rule)."""
    for c in candidates:
        if n % c == 0 and n >= c:
            return c
    return n


def _learnt_attn_kernel(
    xq_ref, xk_ref, xv_ref,          # (1, tq, D), (1, tk, D), (1, tk, D)
    wq_ref, wk_ref, wv_ref,          # (D, D) each, VMEM resident (constant index_map)
    bq_ref, bk_ref, bv_ref,          # (1, D) each, VMEM resident
    aw_ref,                          # (tq, tk) learnt attention gate tile
    o_ref,                           # (1, tq, D)
    q_scr, m_scr, l_scr, acc_scr,    # f32 VMEM scratch
    *, scale,
):
    ki = pl.program_id(2)

    # ---- init + Q projection: once per (batch, q-tile), at the first kv step ----
    @pl.when(ki == 0)
    def _init():
        q = jnp.dot(xq_ref[0], wq_ref[...], preferred_element_type=jnp.float32)
        # bias then 1/sqrt(d_model) scaling, matching the torch forward order.
        q_scr[...] = (q + bq_ref[...].astype(jnp.float32)) * scale
        m_scr[...] = jnp.full(m_scr.shape, -jnp.inf, jnp.float32)
        l_scr[...] = jnp.zeros(l_scr.shape, jnp.float32)
        acc_scr[...] = jnp.zeros(acc_scr.shape, jnp.float32)

    # ---- K / V projection of this kv tile (weights stay VMEM resident) ----------
    k = jnp.dot(xk_ref[0], wk_ref[...], preferred_element_type=jnp.float32)
    k = k + bk_ref[...].astype(jnp.float32)
    v = jnp.dot(xv_ref[0], wv_ref[...], preferred_element_type=jnp.float32)
    v = v + bv_ref[...].astype(jnp.float32)

    # ---- online softmax update ---------------------------------------------------
    # s = q @ k^T via dot_general on the last dims (no 3-D .T / batched jnp.dot).
    s = jax.lax.dot_general(
        q_scr[...], k, (((1,), (1,)), ((), ())),
        preferred_element_type=jnp.float32)                       # (tq, tk)

    m_prev = m_scr[...]
    m_new = jnp.maximum(m_prev, jnp.max(s, axis=-1, keepdims=True))
    alpha = jnp.exp(m_prev - m_new)                               # rescale of old state
    p = jnp.exp(s - m_new)                                        # unnormalized probs
    l_scr[...] = alpha * l_scr[...] + jnp.sum(p, axis=-1, keepdims=True)
    # Learnt gate multiplies the probabilities (numerator only).
    pw = p * aw_ref[...].astype(jnp.float32)
    acc_scr[...] = alpha * acc_scr[...] + jnp.dot(
        pw, v, preferred_element_type=jnp.float32)
    m_scr[...] = m_new

    # ---- finalize: normalize once, single lane-dense store -----------------------
    @pl.when(ki == pl.num_programs(2) - 1)
    def _finalize():
        inv_l = pl.reciprocal(l_scr[...], approx=True)            # EUP slot
        o_ref[0] = (acc_scr[...] * inv_l).astype(o_ref.dtype)


def learnt_attention(query, key, value, params, *, d_model, seq_length,
                     q_tile=None, kv_tile=None, interpret=False):
    """Fused LearntAttention forward.  params weights are (d_in, d_out) (i.e. torch W.T)."""
    wq, wk, wv = params["wq"], params["wk"], params["wv"]
    bq, bk, bv = params["bq"], params["bk"], params["bv"]
    attn_weight = params["attn_weight"]

    # (S, B, D) -> (B, S, D) transpose detection from the torch forward (plain glue).
    transpose = (query.shape[0] == seq_length) and (query.shape[1] != seq_length)
    if transpose:
        query, key, value = (jnp.swapaxes(a, 0, 1) for a in (query, key, value))

    B, S, D = query.shape
    assert S == seq_length and D == d_model

    # tq: multiple of 8 (sublane) or full axis; tk: multiple of 128 (lane) or full axis.
    tq = q_tile or _pick_tile(S, (512, 256, 128, 64, 32, 16, 8))
    tk = kv_tile or _pick_tile(S, (512, 256, 128))
    assert S % tq == 0 and S % tk == 0

    bq2, bk2, bv2 = (b.reshape(1, D) for b in (bq, bk, bv))
    scale = 1.0 / math.sqrt(d_model)
    grid = (B, S // tq, S // tk)

    kernel = functools.partial(_learnt_attn_kernel, scale=scale)

    out = pl.pallas_call(
        kernel,
        out_shape=jax.ShapeDtypeStruct((B, S, D), query.dtype),
        grid_spec=pltpu.PrefetchScalarGridSpec(
            num_scalar_prefetch=0,
            grid=grid,
            in_specs=[
                pl.BlockSpec((1, tq, D), lambda b, qi, ki: (b, qi, 0)),   # x_q
                pl.BlockSpec((1, tk, D), lambda b, qi, ki: (b, ki, 0)),   # x_k
                pl.BlockSpec((1, tk, D), lambda b, qi, ki: (b, ki, 0)),   # x_v
                pl.BlockSpec((D, D), lambda b, qi, ki: (0, 0)),           # Wq (resident)
                pl.BlockSpec((D, D), lambda b, qi, ki: (0, 0)),           # Wk (resident)
                pl.BlockSpec((D, D), lambda b, qi, ki: (0, 0)),           # Wv (resident)
                pl.BlockSpec((1, D), lambda b, qi, ki: (0, 0)),           # bq
                pl.BlockSpec((1, D), lambda b, qi, ki: (0, 0)),           # bk
                pl.BlockSpec((1, D), lambda b, qi, ki: (0, 0)),           # bv
                pl.BlockSpec((tq, tk), lambda b, qi, ki: (qi, ki)),       # learnt gate
            ],
            out_specs=pl.BlockSpec((1, tq, D), lambda b, qi, ki: (b, qi, 0)),
            scratch_shapes=[
                pltpu.VMEM((tq, D), jnp.float32),   # projected + scaled Q
                pltpu.VMEM((tq, 1), jnp.float32),   # running max m
                pltpu.VMEM((tq, 1), jnp.float32),   # running denominator l
                pltpu.VMEM((tq, D), jnp.float32),   # output accumulator
            ],
        ),
        compiler_params=pltpu.CompilerParams(
            dimension_semantics=("parallel", "parallel", "arbitrary")),
        interpret=interpret,
    )(query, key, value, wq, wk, wv, bq2, bk2, bv2, attn_weight)

    if transpose:
        out = jnp.swapaxes(out, 0, 1)
    return out


def learnt_attention_ref(query, key, value, params, *, d_model, seq_length):
    """Pure-JAX reference matching the PyTorch forward."""
    transpose = (query.shape[0] == seq_length) and (query.shape[1] != seq_length)
    if transpose:
        query, key, value = (jnp.swapaxes(a, 0, 1) for a in (query, key, value))
    q = query @ params["wq"] + params["bq"]
    k = key @ params["wk"] + params["bk"]
    v = value @ params["wv"] + params["bv"]
    q = q / np.sqrt(d_model)
    s = jnp.einsum("bqd,bkd->bqk", q, k)
    p = jax.nn.softmax(s, axis=-1)
    p = params["attn_weight"][None, :, :] * p
    out = jnp.einsum("bqk,bkd->bqd", p, v)
    if transpose:
        out = jnp.swapaxes(out, 0, 1)
    return out


if __name__ == "__main__":
    B, S, D = 2, 8, 32  # batch, seq_length, d_model
    ks = jax.random.split(jax.random.PRNGKey(0), 10)
    query = jax.random.normal(ks[0], (B, S, D), jnp.float32)
    key_in = jax.random.normal(ks[1], (B, S, D), jnp.float32)
    value_in = jax.random.normal(ks[2], (B, S, D), jnp.float32)

    w_scale = 1.0 / np.sqrt(D)
    xavier_tanh = (5.0 / 3.0) * np.sqrt(6.0 / (S + S))
    params = {
        "wq": jax.random.normal(ks[3], (D, D), jnp.float32) * w_scale,
        "wk": jax.random.normal(ks[4], (D, D), jnp.float32) * w_scale,
        "wv": jax.random.normal(ks[5], (D, D), jnp.float32) * w_scale,
        "bq": jax.random.normal(ks[6], (D,), jnp.float32) * 0.1,
        "bk": jax.random.normal(ks[7], (D,), jnp.float32) * 0.1,
        "bv": jax.random.normal(ks[8], (D,), jnp.float32) * 0.1,
        "attn_weight": jax.random.uniform(
            ks[9], (S, S), jnp.float32, -1.0, 1.0) * xavier_tanh,
    }

    run = jax.jit(functools.partial(learnt_attention, d_model=D, seq_length=S))

    # batch-first (B, S, D) path
    out = jax.block_until_ready(run(query, key_in, value_in, params))
    ref = learnt_attention_ref(query, key_in, value_in, params, d_model=D, seq_length=S)
    np.testing.assert_allclose(np.asarray(out), np.asarray(ref), rtol=1e-2, atol=1e-2)

    # seq-first (S, B, D) path exercises the forward's transpose detection
    q2, k2, v2 = (jnp.swapaxes(a, 0, 1) for a in (query, key_in, value_in))
    out2 = jax.block_until_ready(run(q2, k2, v2, params))
    ref2 = learnt_attention_ref(q2, k2, v2, params, d_model=D, seq_length=S)
    np.testing.assert_allclose(np.asarray(out2), np.asarray(ref2), rtol=1e-2, atol=1e-2)

    print("KERNEL_OK")
</pallas_src>

<mosaic_0001>
module attributes {stable_mosaic.version = 11 : i64} {
  func.func @_learnt_attn_kernel(%arg0: i32, %arg1: i32, %arg2: i32, %arg3: memref<1x8x32xf32, #tpu.memory_space<vmem>>, %arg4: memref<1x8x32xf32, #tpu.memory_space<vmem>>, %arg5: memref<1x8x32xf32, #tpu.memory_space<vmem>>, %arg6: memref<32x32xf32, #tpu.memory_space<vmem>>, %arg7: memref<32x32xf32, #tpu.memory_space<vmem>>, %arg8: memref<32x32xf32, #tpu.memory_space<vmem>>, %arg9: memref<1x32xf32, #tpu.memory_space<vmem>>, %arg10: memref<1x32xf32, #tpu.memory_space<vmem>>, %arg11: memref<1x32xf32, #tpu.memory_space<vmem>>, %arg12: memref<8x8xf32, #tpu.memory_space<vmem>>, %arg13: memref<1x8x32xf32, #tpu.memory_space<vmem>>, %arg14: memref<8x32xf32, #tpu.memory_space<vmem>>, %arg15: memref<8x1xf32, #tpu.memory_space<vmem>>, %arg16: memref<8x1xf32, #tpu.memory_space<vmem>>, %arg17: memref<8x32xf32, #tpu.memory_space<vmem>>) attributes {dimension_semantics = [#tpu.dimension_semantics<parallel>, #tpu.dimension_semantics<parallel>, #tpu.dimension_semantics<arbitrary>], iteration_bounds = array<i64: 2, 1, 1>, scalar_prefetch = 0 : i64, scratch_operands = 4 : i64, tpu.core_type = #tpu.core_type<tc>, window_params = [{transform_indices = @transform_0, window_bounds = array<i64: 1, 8, 32>}, {transform_indices = @transform_1, window_bounds = array<i64: 1, 8, 32>}, {transform_indices = @transform_2, window_bounds = array<i64: 1, 8, 32>}, {pipeline_mode = #tpu.pipeline_mode<synchronous>, transform_indices = @transform_3, window_bounds = array<i64: 32, 32>}, {pipeline_mode = #tpu.pipeline_mode<synchronous>, transform_indices = @transform_4, window_bounds = array<i64: 32, 32>}, {pipeline_mode = #tpu.pipeline_mode<synchronous>, transform_indices = @transform_5, window_bounds = array<i64: 32, 32>}, {pipeline_mode = #tpu.pipeline_mode<synchronous>, transform_indices = @transform_6, window_bounds = array<i64: 1, 32>}, {pipeline_mode = #tpu.pipeline_mode<synchronous>, transform_indices = @transform_7, window_bounds = array<i64: 1, 32>}, {pipeline_mode = #tpu.pipeline_mode<synchronous>, transform_indices = @transform_8, window_bounds = array<i64: 1, 32>}, {transform_indices = @transform_9, window_bounds = array<i64: 8, 8>}, {transform_indices = @transform_10, window_bounds = array<i64: 1, 8, 32>}]} {
    %c0_i32 = arith.constant 0 : i32
    %0 = arith.cmpi eq, %arg2, %c0_i32 : i32
    %1 = arith.extui %0 : i1 to i32
    %c0_i32_0 = arith.constant 0 : i32
    %2 = arith.cmpi ne, %1, %c0_i32_0 : i32
    scf.if %2 {
      %c0_37 = arith.constant 0 : index
      %c0_38 = arith.constant 0 : index
      %c0_39 = arith.constant 0 : index
      %46 = vector.load %arg3[%c0_37, %c0_38, %c0_39] : memref<1x8x32xf32, #tpu.memory_space<vmem>>, vector<1x8x32xf32>
      %47 = vector.shape_cast %46 : vector<1x8x32xf32> to vector<8x32xf32>
      %c0_40 = arith.constant 0 : index
      %c0_41 = arith.constant 0 : index
      %48 = vector.load %arg6[%c0_40, %c0_41] : memref<32x32xf32, #tpu.memory_space<vmem>>, vector<32x32xf32>
      %cst_42 = arith.constant dense<0.000000e+00> : vector<8x32xf32>
      %49 = tpu.matmul %47, %48, %cst_42 {dimension_numbers = #tpu.dot_dimension_numbers<[1], [0], [0], [1], [0, 0, 1, 1], [], []>} : vector<8x32xf32>, vector<32x32xf32>, vector<8x32xf32> -> vector<8x32xf32>
      %c0_43 = arith.constant 0 : index
      %c0_44 = arith.constant 0 : index
      %50 = vector.load %arg9[%c0_43, %c0_44] : memref<1x32xf32, #tpu.memory_space<vmem>>, vector<1x32xf32>
      %51 = vector.broadcast %50 : vector<1x32xf32> to vector<8x32xf32>
      %52 = arith.addf %49, %51 : vector<8x32xf32>
      %cst_45 = arith.constant 0.176776692 : f32
      %53 = vector.broadcast %cst_45 : f32 to vector<8x32xf32>
      %54 = arith.mulf %52, %53 : vector<8x32xf32>
      %c0_46 = arith.constant 0 : index
      %c0_47 = arith.constant 0 : index
      %55 = vector.load %arg14[%c0_46, %c0_47] : memref<8x32xf32, #tpu.memory_space<vmem>>, vector<8x32xf32>
      tpu.vector_store %arg14[%c0_46, %c0_47], %54 {strides = array<i32>} : memref<8x32xf32, #tpu.memory_space<vmem>>, vector<8x32xf32>,
      %cst_48 = arith.constant 0xFF800000 : f32
      %56 = vector.broadcast %cst_48 : f32 to vector<8x1xf32>
      %c0_49 = arith.constant 0 : index
      %c0_50 = arith.constant 0 : index
      %57 = vector.load %arg15[%c0_49, %c0_50] : memref<8x1xf32, #tpu.memory_space<vmem>>, vector<8x1xf32>
      tpu.vector_store %arg15[%c0_49, %c0_50], %56 {strides = array<i32>} : memref<8x1xf32, #tpu.memory_space<vmem>>, vector<8x1xf32>,
      %cst_51 = arith.constant 0.000000e+00 : f32
      %58 = vector.broadcast %cst_51 : f32 to vector<8x1xf32>
      %c0_52 = arith.constant 0 : index
      %c0_53 = arith.constant 0 : index
      %59 = vector.load %arg16[%c0_52, %c0_53] : memref<8x1xf32, #tpu.memory_space<vmem>>, vector<8x1xf32>
      tpu.vector_store %arg16[%c0_52, %c0_53], %58 {strides = array<i32>} : memref<8x1xf32, #tpu.memory_space<vmem>>, vector<8x1xf32>,
      %cst_54 = arith.constant 0.000000e+00 : f32
      %60 = vector.broadcast %cst_54 : f32 to vector<8x32xf32>
      %c0_55 = arith.constant 0 : index
      %c0_56 = arith.constant 0 : index
      %61 = vector.load %arg17[%c0_55, %c0_56] : memref<8x32xf32, #tpu.memory_space<vmem>>, vector<8x32xf32>
      tpu.vector_store %arg17[%c0_55, %c0_56], %60 {strides = array<i32>} : memref<8x32xf32, #tpu.memory_space<vmem>>, vector<8x32xf32>,
    } else {
    }
    %c0 = arith.constant 0 : index
    %c0_1 = arith.constant 0 : index
    %c0_2 = arith.constant 0 : index
    %3 = vector.load %arg4[%c0, %c0_1, %c0_2] : memref<1x8x32xf32, #tpu.memory_space<vmem>>, vector<1x8x32xf32>
    %4 = vector.shape_cast %3 : vector<1x8x32xf32> to vector<8x32xf32>
    %c0_3 = arith.constant 0 : index
    %c0_4 = arith.constant 0 : index
    %5 = vector.load %arg7[%c0_3, %c0_4] : memref<32x32xf32, #tpu.memory_space<vmem>>, vector<32x32xf32>
    %cst = arith.constant dense<0.000000e+00> : vector<8x32xf32>
    %6 = tpu.matmul %4, %5, %cst {dimension_numbers = #tpu.dot_dimension_numbers<[1], [0], [0], [1], [0, 0, 1, 1], [], []>} : vector<8x32xf32>, vector<32x32xf32>, vector<8x32xf32> -> vector<8x32xf32>
    %c0_5 = arith.constant 0 : index
    %c0_6 = arith.constant 0 : index
    %7 = vector.load %arg10[%c0_5, %c0_6] : memref<1x32xf32, #tpu.memory_space<vmem>>, vector<1x32xf32>
    %8 = vector.broadcast %7 : vector<1x32xf32> to vector<8x32xf32>
    %9 = arith.addf %6, %8 : vector<8x32xf32>
    %c0_7 = arith.constant 0 : index
    %c0_8 = arith.constant 0 : index
    %c0_9 = arith.constant 0 : index
    %10 = vector.load %arg5[%c0_7, %c0_8, %c0_9] : memref<1x8x32xf32, #tpu.memory_space<vmem>>, vector<1x8x32xf32>
    %11 = vector.shape_cast %10 : vector<1x8x32xf32> to vector<8x32xf32>
    %c0_10 = arith.constant 0 : index
    %c0_11 = arith.constant 0 : index
    %12 = vector.load %arg8[%c0_10, %c0_11] : memref<32x32xf32, #tpu.memory_space<vmem>>, vector<32x32xf32>
    %cst_12 = arith.constant dense<0.000000e+00> : vector<8x32xf32>
    %13 = tpu.matmul %11, %12, %cst_12 {dimension_numbers = #tpu.dot_dimension_numbers<[1], [0], [0], [1], [0, 0, 1, 1], [], []>} : vector<8x32xf32>, vector<32x32xf32>, vector<8x32xf32> -> vector<8x32xf32>
    %c0_13 = arith.constant 0 : index
    %c0_14 = arith.constant 0 : index
    %14 = vector.load %arg11[%c0_13, %c0_14] : memref<1x32xf32, #tpu.memory_space<vmem>>, vector<1x32xf32>
    %15 = vector.broadcast %14 : vector<1x32xf32> to vector<8x32xf32>
    %16 = arith.addf %13, %15 : vector<8x32xf32>
    %c0_15 = arith.constant 0 : index
    %c0_16 = arith.constant 0 : index
    %17 = vector.load %arg14[%c0_15, %c0_16] : memref<8x32xf32, #tpu.memory_space<vmem>>, vector<8x32xf32>
    %cst_17 = arith.constant dense<0.000000e+00> : vector<8x8xf32>
    %18 = tpu.matmul %17, %9, %cst_17 {dimension_numbers = #tpu.dot_dimension_numbers<[1], [1], [0], [0], [0, 0, 1, 0], [], []>} : vector<8x32xf32>, vector<8x32xf32>, vector<8x8xf32> -> vector<8x8xf32>
    %c0_18 = arith.constant 0 : index
    %c0_19 = arith.constant 0 : index
    %19 = vector.load %arg15[%c0_18, %c0_19] : memref<8x1xf32, #tpu.memory_space<vmem>>, vector<8x1xf32>
    %cst_20 = arith.constant dense<0xFF800000> : vector<8xf32>
    %20 = vector.multi_reduction <maximumf>, %18, %cst_20 [1] : vector<8x8xf32> to vector<8xf32>
    %21 = vector.shape_cast %20 : vector<8xf32> to vector<8x1xf32>
    %22 = arith.maximumf %19, %21 : vector<8x1xf32>
    %23 = arith.subf %19, %22 : vector<8x1xf32>
    %24 = math.exp %23 : vector<8x1xf32>
    %25 = vector.broadcast %22 : vector<8x1xf32> to vector<8x8xf32>
    %26 = arith.subf %18, %25 : vector<8x8xf32>
    %27 = math.exp %26 : vector<8x8xf32>
    %c0_21 = arith.constant 0 : index
    %c0_22 = arith.constant 0 : index
    %28 = vector.load %arg16[%c0_21, %c0_22] : memref<8x1xf32, #tpu.memory_space<vmem>>, vector<8x1xf32>
    %29 = arith.mulf %24, %28 : vector<8x1xf32>
    %cst_23 = arith.constant dense<0.000000e+00> : vector<8xf32>
    %30 = vector.multi_reduction <add>, %27, %cst_23 [1] : vector<8x8xf32> to vector<8xf32>
    %31 = vector.shape_cast %30 : vector<8xf32> to vector<8x1xf32>
    %32 = arith.addf %29, %31 : vector<8x1xf32>
    %c0_24 = arith.constant 0 : index
    %c0_25 = arith.constant 0 : index
    %33 = vector.load %arg16[%c0_24, %c0_25] : memref<8x1xf32, #tpu.memory_space<vmem>>, vector<8x1xf32>
    tpu.vector_store %arg16[%c0_24, %c0_25], %32 {strides = array<i32>} : memref<8x1xf32, #tpu.memory_space<vmem>>, vector<8x1xf32>,
    %c0_26 = arith.constant 0 : index
    %c0_27 = arith.constant 0 : index
    %34 = vector.load %arg12[%c0_26, %c0_27] : memref<8x8xf32, #tpu.memory_space<vmem>>, vector<8x8xf32>
    %35 = arith.mulf %27, %34 : vector<8x8xf32>
    %c0_28 = arith.constant 0 : index
    %c0_29 = arith.constant 0 : index
    %36 = vector.load %arg17[%c0_28, %c0_29] : memref<8x32xf32, #tpu.memory_space<vmem>>, vector<8x32xf32>
    %37 = vector.broadcast %24 : vector<8x1xf32> to vector<8x32xf32>
    %38 = arith.mulf %37, %36 : vector<8x32xf32>
    %cst_30 = arith.constant dense<0.000000e+00> : vector<8x32xf32>
    %39 = tpu.matmul %35, %16, %cst_30 {dimension_numbers = #tpu.dot_dimension_numbers<[1], [0], [0], [1], [0, 0, 1, 1], [], []>} : vector<8x8xf32>, vector<8x32xf32>, vector<8x32xf32> -> vector<8x32xf32>
    %40 = arith.addf %38, %39 : vector<8x32xf32>
    %c0_31 = arith.constant 0 : index
    %c0_32 = arith.constant 0 : index
    %41 = vector.load %arg17[%c0_31, %c0_32] : memref<8x32xf32, #tpu.memory_space<vmem>>, vector<8x32xf32>
    tpu.vector_store %arg17[%c0_31, %c0_32], %40 {strides = array<i32>} : memref<8x32xf32, #tpu.memory_space<vmem>>, vector<8x32xf32>,
    %c0_33 = arith.constant 0 : index
    %c0_34 = arith.constant 0 : index
    %42 = vector.load %arg15[%c0_33, %c0_34] : memref<8x1xf32, #tpu.memory_space<vmem>>, vector<8x1xf32>
    tpu.vector_store %arg15[%c0_33, %c0_34], %22 {strides = array<i32>} : memref<8x1xf32, #tpu.memory_space<vmem>>, vector<8x1xf32>,
    %c0_i32_35 = arith.constant 0 : i32
    %43 = arith.cmpi eq, %arg2, %c0_i32_35 : i32
    %44 = arith.extui %43 : i1 to i32
    %c0_i32_36 = arith.constant 0 : i32
    %45 = arith.cmpi ne, %44, %c0_i32_36 : i32
    scf.if %45 {
      %c0_37 = arith.constant 0 : index
      %c0_38 = arith.constant 0 : index
      %46 = vector.load %arg16[%c0_37, %c0_38] : memref<8x1xf32, #tpu.memory_space<vmem>>, vector<8x1xf32>
      %47 = tpu.reciprocal %46 {approx = true} : vector<8x1xf32> -> vector<8x1xf32>
      %c0_39 = arith.constant 0 : index
      %c0_40 = arith.constant 0 : index
      %48 = vector.load %arg17[%c0_39, %c0_40] : memref<8x32xf32, #tpu.memory_space<vmem>>, vector<8x32xf32>
      %49 = vector.broadcast %47 : vector<8x1xf32> to vector<8x32xf32>
      %50 = arith.mulf %48, %49 : vector<8x32xf32>
      %c0_41 = arith.constant 0 : index
      %c0_42 = arith.constant 0 : index
      %c0_43 = arith.constant 0 : index
      %51 = vector.load %arg13[%c0_41, %c0_42, %c0_43] : memref<1x8x32xf32, #tpu.memory_space<vmem>>, vector<1x8x32xf32>
      %52 = vector.shape_cast %51 : vector<1x8x32xf32> to vector<8x32xf32>
      %53 = vector.shape_cast %50 : vector<8x32xf32> to vector<1x8x32xf32>
      tpu.vector_store %arg13[%c0_41, %c0_42, %c0_43], %53 {strides = array<i32>} : memref<1x8x32xf32, #tpu.memory_space<vmem>>, vector<1x8x32xf32>,
    } else {
    }
    return
  }
  func.func @transform_0(%arg0: i32, %arg1: i32, %arg2: i32) -> (i32, i32, i32) {
    %c0_i32 = arith.constant 0 : i32
    %c0_i32_0 = arith.constant 0 : i32
    return %arg0, %arg1, %c0_i32 : i32, i32, i32
  }
  func.func @transform_1(%arg0: i32, %arg1: i32, %arg2: i32) -> (i32, i32, i32) {
    %c0_i32 = arith.constant 0 : i32
    %c0_i32_0 = arith.constant 0 : i32
    return %arg0, %arg2, %c0_i32 : i32, i32, i32
  }
  func.func @transform_2(%arg0: i32, %arg1: i32, %arg2: i32) -> (i32, i32, i32) {
    %c0_i32 = arith.constant 0 : i32
    %c0_i32_0 = arith.constant 0 : i32
    return %arg0, %arg2, %c0_i32 : i32, i32, i32
  }
  func.func @transform_3(%arg0: i32, %arg1: i32, %arg2: i32) -> (i32, i32) {
    %c0_i32 = arith.constant 0 : i32
    %c0_i32_0 = arith.constant 0 : i32
    %c0_i32_1 = arith.constant 0 : i32
    return %c0_i32, %c0_i32_0 : i32, i32
  }
  func.func @transform_4(%arg0: i32, %arg1: i32, %arg2: i32) -> (i32, i32) {
    %c0_i32 = arith.constant 0 : i32
    %c0_i32_0 = arith.constant 0 : i32
    %c0_i32_1 = arith.constant 0 : i32
    return %c0_i32, %c0_i32_0 : i32, i32
  }
  func.func @transform_5(%arg0: i32, %arg1: i32, %arg2: i32) -> (i32, i32) {
    %c0_i32 = arith.constant 0 : i32
    %c0_i32_0 = arith.constant 0 : i32
    %c0_i32_1 = arith.constant 0 : i32
    return %c0_i32, %c0_i32_0 : i32, i32
  }
  func.func @transform_6(%arg0: i32, %arg1: i32, %arg2: i32) -> (i32, i32) {
    %c0_i32 = arith.constant 0 : i32
    %c0_i32_0 = arith.constant 0 : i32
    %c0_i32_1 = arith.constant 0 : i32
    return %c0_i32, %c0_i32_0 : i32, i32
  }
  func.func @transform_7(%arg0: i32, %arg1: i32, %arg2: i32) -> (i32, i32) {
    %c0_i32 = arith.constant 0 : i32
    %c0_i32_0 = arith.constant 0 : i32
    %c0_i32_1 = arith.constant 0 : i32
    return %c0_i32, %c0_i32_0 : i32, i32
  }
  func.func @transform_8(%arg0: i32, %arg1: i32, %arg2: i32) -> (i32, i32) {
    %c0_i32 = arith.constant 0 : i32
    %c0_i32_0 = arith.constant 0 : i32
    %c0_i32_1 = arith.constant 0 : i32
    return %c0_i32, %c0_i32_0 : i32, i32
  }
  func.func @transform_9(%arg0: i32, %arg1: i32, %arg2: i32) -> (i32, i32) {
    %c0_i32 = arith.constant 0 : i32
    return %arg1, %arg2 : i32, i32
  }
  func.func @transform_10(%arg0: i32, %arg1: i32, %arg2: i32) -> (i32, i32, i32) {
    %c0_i32 = arith.constant 0 : i32
    %c0_i32_0 = arith.constant 0 : i32
    return %arg0, %arg1, %c0_i32 : i32, i32, i32
  }
}

</mosaic_0001>

<llo_original>
// kernel: learnt_attention.1
$region0: #{learnt_attention.1}
  #allocation0 [shape = 'u32[]', space=smem, size = 0x4, offset = 0x4, fixed_abs, tag = 'smem constant byte address 0x4 - core index']
  #allocation1 [shape = 'u32[72,128]{1,0:T(1,128)}', space=vmem, size = 0x9000, scoped, tag = 'internal scratch']
  #allocation2 [shape = 'f32[8,32]{1,0:T(8,128)}', space=vmem, size = 0x1000, scoped, tag = 'scratch operand']
  #allocation3 [shape = 'f32[8,1]{1,0:T(8,128)}', space=vmem, size = 0x1000, scoped, tag = 'scratch operand']
  #allocation4 [shape = 'f32[8,1]{1,0:T(8,128)}', space=vmem, size = 0x1000, scoped, tag = 'scratch operand']
  #allocation5 [shape = 'f32[8,32]{1,0:T(8,128)}', space=vmem, size = 0x1000, scoped, tag = 'scratch operand']
  %s0 = inlined_call_operand.hbm [shape: f32[2,8,32], index: 0, kind: input, shape index: {}]
  %s1 = inlined_call_operand.hbm [shape: f32[2,8,32], index: 1, kind: input, shape index: {}]
  %s2 = inlined_call_operand.hbm [shape: f32[2,8,32], index: 2, kind: input, shape index: {}]
  %s3 = inlined_call_operand.hbm [shape: f32[32,32], index: 3, kind: input, shape index: {}]
  %s4 = inlined_call_operand.hbm [shape: f32[32,32], index: 4, kind: input, shape index: {}]
  %s5 = inlined_call_operand.hbm [shape: f32[32,32], index: 5, kind: input, shape index: {}]
  %s6 = inlined_call_operand.vmem [shape: f32[1,32], index: 6, kind: input, shape index: {}]
  %s7 = inlined_call_operand.vmem [shape: f32[1,32], index: 7, kind: input, shape index: {}]
  %s8 = inlined_call_operand.vmem [shape: f32[1,32], index: 8, kind: input, shape index: {}]
  %s9 = inlined_call_operand.hbm [shape: f32[8,8], index: 9, kind: input, shape index: {}]
  %s10 = inlined_call_operand.hbm [shape: f32[2,8,32], index: 10, kind: output, shape index: {}]
  %s11 = sld [smem:[#allocation0]]
  $region109: #{learnt_attention.1} parent=0
    _
  %s13 = ssub.s32 1, %s11
  %s14 = scalar_select 0, %s13, %s11
  $region1: #{learnt_attention.1} parent=0
    #allocation6 [shape = 'u8[8192]{0}', space=vmem, size = 0x2000, scoped, tag = 'input window, operand 0']
    #allocation7 [shape = 's32[2]{0}', space=sflag, size = 0x8, scoped, tag = 'scoped memory for learnt_attention.1']
    #allocation8 [shape = 's32[2]{0}', space=sflag, size = 0x8, scoped, tag = 'scoped memory for learnt_attention.1']
    #allocation9 [shape = 'u8[8192]{0}', space=vmem, size = 0x2000, scoped, tag = 'input window, operand 1']
    #allocation10 [shape = 's32[2]{0}', space=sflag, size = 0x8, scoped, tag = 'scoped memory for learnt_attention.1']
    #allocation11 [shape = 'u8[8192]{0}', space=vmem, size = 0x2000, scoped, tag = 'input window, operand 2']
    #allocation12 [shape = 'u8[16384]{0}', space=vmem, size = 0x4000, scoped, tag = 'input window, operand 3, single buffered']
    #allocation13 [shape = 's32[1]{0}', space=sflag, size = 0x4, scoped, tag = 'scoped memory for learnt_attention.1']
    #allocation14 [shape = 'u8[16384]{0}', space=vmem, size = 0x4000, scoped, tag = 'input window, operand 4, single buffered']
    #allocation15 [shape = 'u8[16384]{0}', space=vmem, size = 0x4000, scoped, tag = 'input window, operand 5, single buffered']
    #allocation16 [shape = 's32[1]{0}', space=sflag, size = 0x4, scoped, tag = 'scoped memory for learnt_attention.1']
    #allocation17 [shape = 'u8[4096]{0}', space=vmem, size = 0x1000, scoped, tag = 'input window, operand 9, single buffered']
    #allocation18 [shape = 'u8[8192]{0}', space=vmem, size = 0x2000, scoped, tag = 'output window, operand 0']
    %15 = vsyncpa [#allocation7], 0
    %s16 = scalar_lea.sflag [#allocation7], 1
    %17 = vsyncpa %s16, 0
    %18 = vsyncpa [#allocation10], 0
    %s19 = scalar_lea.sflag [#allocation10], 1
    %20 = vsyncpa %s19, 0
    %21 = vsyncpa [#allocation13], 0
    %22 = vsyncpa [#allocation16], 0
    %23 = vsyncpa [#allocation8], 0
    %s24 = scalar_lea.sflag [#allocation8], 1
    %25 = vsyncpa %s24, 0
    loop: start=0, step=1, limit=4
    $region2: #{learnt_attention.1} parent=1 // loop_pre_header
      _
    $region3: #{learnt_attention.1} parent=1 // loop_header
      %s27 = sphi 0, %s31
      %p28 = scmp.ge.s32.totalorder %s27, 4
      %s34 = sphi 0, %s53
      %s35 = sphi 0, %s49
      %s36 = sphi 0, %s45
      %s37 = sphi 0, %s34
      %s38 = sphi 0, %s35
      %s39 = sphi 0, %s36
      %s40 = sphi 0, %s37
      %s41 = sphi 0, %s38
      %s42 = sphi 0, %s39
      %s58 = sphi 0, %s60
      %s61 = sphi 0, %s58
      %s62 = sphi 0, %s61
      %s78 = sphi 0, %s62
      %s86 = sphi 0, %s88
      %s89 = sphi 0, %s86
      %s90 = sphi 0, %s89
      %s106 = sphi 0, %s90
      %s114 = sphi 0, %s116
      %s117 = sphi 0, %s114
      %s118 = sphi 0, %s117
      %s134 = sphi 0, %s118
      %s138 = sphi 0, %s138
      %s140 = sphi 0, %s138
      %s141 = sphi 0, %s140
      %s155 = sphi 0, %s141
      %s159 = sphi 0, %s159
      %s161 = sphi 0, %s159
      %s162 = sphi 0, %s161
      %s176 = sphi 0, %s162
      %s180 = sphi 0, %s180
      %s182 = sphi 0, %s180
      %s183 = sphi 0, %s182
      %s197 = sphi 0, %s183
      %s201 = sphi 0, %s201
      %s203 = sphi 0, %s201
      %s204 = sphi 0, %s203
      %s218 = sphi 0, %s204
      %s222 = sphi 0, %s222
      %s224 = sphi 0, %s222
      %s225 = sphi 0, %s224
      %s239 = sphi 0, %s225
      %s243 = sphi 0, %s243
      %s245 = sphi 0, %s243
      %s246 = sphi 0, %s245
      %s260 = sphi 0, %s246
      %s268 = sphi 0, %s270
      %s271 = sphi 0, %s268
      %s272 = sphi 0, %s271
      %s288 = sphi 0, %s272
      %s296 = sphi 0, %s298
      %s299 = sphi 0, %s296
      %s300 = sphi 0, %s299
      %s316 = sphi 0, %s300
    $region4: #{learnt_attention.1} parent=1 // loop_header_branch
      %30 = sbr.rel (%p28) target = $region8
    $region5: #{learnt_attention.1} parent=1 // loop_body
      %s32 = ssub.s32 %s27, 1
      %s33 = ssub.s32 %s27, 2
      %s43 = sadd.s32 1, %s36
      %p44 = scmp.ge.s32.totalorder %s43, 1
      %s45 = scalar_select %p44, 0, %s43
      %s46 = sadd.s32 1, %s35
      %s47 = scalar_select %p44, %s46, %s35
      %p48 = scmp.ge.s32.totalorder %s47, 1
      %s49 = scalar_select %p48, 0, %s47
      %s50 = sadd.s32 1, %s34
      %s51 = scalar_select %p48, %s50, %s34
      %p52 = scmp.ge.s32.totalorder %s51, 2
      %s53 = scalar_select %p52, 0, %s51
      %s54 = ssub.s32 %s34, %s53
      %s55 = ssub.s32 %s35, %s49
      %s56 = sor.u32 %s54, %s55
      %p57 = scmp.eq.s32.totalorder %s56, 0
      %s59 = sadd.s32 %s58, 1
      %s60 = scalar_select %p57, %s58, %s59
      %p63 = pneg %p57
      %p64 = scmp.eq.s32.totalorder %s27, 1
      %p65 = por %p63, %p64
      %p66 = scmp.ne.s32.totalorder %s58, %s61
      %p67 = scmp.eq.s32.totalorder %s27, 0
      %p68 = por %p66, %p67
      %p69 = scmp.ne.s32.totalorder %s58, %s61
      %p70 = scmp.eq.s32.totalorder %s32, 1
      %p71 = por %p69, %p70
      %p72 = scmp.ne.s32.totalorder %s61, %s62
      %p73 = scmp.eq.s32.totalorder %s32, 0
      %p74 = por %p72, %p73
      %p75 = scmp.ne.s32.totalorder %s61, %s62
      %p76 = scmp.eq.s32.totalorder %s33, 1
      %p77 = por %p75, %p76
      %p79 = scmp.ne.s32.totalorder %s62, %s78
      %p80 = scmp.eq.s32.totalorder %s33, 0
      %p81 = por %p79, %p80
      %s82 = ssub.s32 %s34, %s53
      %s83 = ssub.s32 %s36, %s45
      %s84 = sor.u32 %s82, %s83
      %p85 = scmp.eq.s32.totalorder %s84, 0
      %s87 = sadd.s32 %s86, 1
      %s88 = scalar_select %p85, %s86, %s87
      %p91 = pneg %p85
      %p92 = scmp.eq.s32.totalorder %s27, 1
      %p93 = por %p91, %p92
      %p94 = scmp.ne.s32.totalorder %s86, %s89
      %p95 = scmp.eq.s32.totalorder %s27, 0
      %p96 = por %p94, %p95
      %p97 = scmp.ne.s32.totalorder %s86, %s89
      %p98 = scmp.eq.s32.totalorder %s32, 1
      %p99 = por %p97, %p98
      %p100 = scmp.ne.s32.totalorder %s89, %s90
      %p101 = scmp.eq.s32.totalorder %s32, 0
      %p102 = por %p100, %p101
      %p103 = scmp.ne.s32.totalorder %s89, %s90
      %p104 = scmp.eq.s32.totalorder %s33, 1
      %p105 = por %p103, %p104
      %p107 = scmp.ne.s32.totalorder %s90, %s106
      %p108 = scmp.eq.s32.totalorder %s33, 0
      %p109 = por %p107, %p108
      %s110 = ssub.s32 %s34, %s53
      %s111 = ssub.s32 %s36, %s45
      %s112 = sor.u32 %s110, %s111
      %p113 = scmp.eq.s32.totalorder %s112, 0
      %s115 = sadd.s32 %s114, 1
      %s116 = scalar_select %p113, %s114, %s115
      %p119 = pneg %p113
      %p120 = scmp.eq.s32.totalorder %s27, 1
      %p121 = por %p119, %p120
      %p122 = scmp.ne.s32.totalorder %s114, %s117
      %p123 = scmp.eq.s32.totalorder %s27, 0
      %p124 = por %p122, %p123
      %p125 = scmp.ne.s32.totalorder %s114, %s117
      %p126 = scmp.eq.s32.totalorder %s32, 1
      %p127 = por %p125, %p126
      %p128 = scmp.ne.s32.totalorder %s117, %s118
      %p129 = scmp.eq.s32.totalorder %s32, 0
      %p130 = por %p128, %p129
      %p131 = scmp.ne.s32.totalorder %s117, %s118
      %p132 = scmp.eq.s32.totalorder %s33, 1
      %p133 = por %p131, %p132
      %p135 = scmp.ne.s32.totalorder %s118, %s134
      %p136 = scmp.eq.s32.totalorder %s33, 0
      %p137 = por %p135, %p136
      %s139 = sadd.s32 %s138, 1
      %p142 = scmp.eq.s32.totalorder %s27, 1
      %p143 = scmp.ne.s32.totalorder %s138, %s140
      %p144 = scmp.eq.s32.totalorder %s27, 0
      %p145 = por %p143, %p144
      %p146 = scmp.ne.s32.totalorder %s138, %s140
      %p147 = scmp.eq.s32.totalorder %s32, 1
      %p148 = por %p146, %p147
      %p149 = scmp.ne.s32.totalorder %s140, %s141
      %p150 = scmp.eq.s32.totalorder %s32, 0
      %p151 = por %p149, %p150
      %p152 = scmp.ne.s32.totalorder %s140, %s141
      %p153 = scmp.eq.s32.totalorder %s33, 1
      %p154 = por %p152, %p153
      %p156 = scmp.ne.s32.totalorder %s141, %s155
      %p157 = scmp.eq.s32.totalorder %s33, 0
      %p158 = por %p156, %p157
      %s160 = sadd.s32 %s159, 1
      %p163 = scmp.eq.s32.totalorder %s27, 1
      %p164 = scmp.ne.s32.totalorder %s159, %s161
      %p165 = scmp.eq.s32.totalorder %s27, 0
      %p166 = por %p164, %p165
      %p167 = scmp.ne.s32.totalorder %s159, %s161
      %p168 = scmp.eq.s32.totalorder %s32, 1
      %p169 = por %p167, %p168
      %p170 = scmp.ne.s32.totalorder %s161, %s162
      %p171 = scmp.eq.s32.totalorder %s32, 0
      %p172 = por %p170, %p171
      %p173 = scmp.ne.s32.totalorder %s161, %s162
      %p174 = scmp.eq.s32.totalorder %s33, 1
      %p175 = por %p173, %p174
      %p177 = scmp.ne.s32.totalorder %s162, %s176
      %p178 = scmp.eq.s32.totalorder %s33, 0
      %p179 = por %p177, %p178
      %s181 = sadd.s32 %s180, 1
      %p184 = scmp.eq.s32.totalorder %s27, 1
      %p185 = scmp.ne.s32.totalorder %s180, %s182
      %p186 = scmp.eq.s32.totalorder %s27, 0
      %p187 = por %p185, %p186
      %p188 = scmp.ne.s32.totalorder %s180, %s182
      %p189 = scmp.eq.s32.totalorder %s32, 1
      %p190 = por %p188, %p189
      %p191 = scmp.ne.s32.totalorder %s182, %s183
      %p192 = scmp.eq.s32.totalorder %s32, 0
      %p193 = por %p191, %p192
      %p194 = scmp.ne.s32.totalorder %s182, %s183
      %p195 = scmp.eq.s32.totalorder %s33, 1
      %p196 = por %p194, %p195
      %p198 = scmp.ne.s32.totalorder %s183, %s197
      %p199 = scmp.eq.s32.totalorder %s33, 0
      %p200 = por %p198, %p199
      %s202 = sadd.s32 %s201, 1
      %p205 = scmp.eq.s32.totalorder %s27, 1
      %p206 = scmp.ne.s32.totalorder %s201, %s203
      %p207 = scmp.eq.s32.totalorder %s27, 0
      %p208 = por %p206, %p207
      %p209 = scmp.ne.s32.totalorder %s201, %s203
      %p210 = scmp.eq.s32.totalorder %s32, 1
      %p211 = por %p209, %p210
      %p212 = scmp.ne.s32.totalorder %s203, %s204
      %p213 = scmp.eq.s32.totalorder %s32, 0
      %p214 = por %p212, %p213
      %p215 = scmp.ne.s32.totalorder %s203, %s204
      %p216 = scmp.eq.s32.totalorder %s33, 1
      %p217 = por %p215, %p216
      %p219 = scmp.ne.s32.totalorder %s204, %s218
      %p220 = scmp.eq.s32.totalorder %s33, 0
      %p221 = por %p219, %p220
      %s223 = sadd.s32 %s222, 1
      %p226 = scmp.eq.s32.totalorder %s27, 1
      %p227 = scmp.ne.s32.totalorder %s222, %s224
      %p228 = scmp.eq.s32.totalorder %s27, 0
      %p229 = por %p227, %p228
      %p230 = scmp.ne.s32.totalorder %s222, %s224
      %p231 = scmp.eq.s32.totalorder %s32, 1
      %p232 = por %p230, %p231
      %p233 = scmp.ne.s32.totalorder %s224, %s225
      %p234 = scmp.eq.s32.totalorder %s32, 0
      %p235 = por %p233, %p234
      %p236 = scmp.ne.s32.totalorder %s224, %s225
      %p237 = scmp.eq.s32.totalorder %s33, 1
      %p238 = por %p236, %p237
      %p240 = scmp.ne.s32.totalorder %s225, %s239
      %p241 = scmp.eq.s32.totalorder %s33, 0
      %p242 = por %p240, %p241
      %s244 = sadd.s32 %s243, 1
      %p247 = scmp.eq.s32.totalorder %s27, 1
      %p248 = scmp.ne.s32.totalorder %s243, %s245
      %p249 = scmp.eq.s32.totalorder %s27, 0
      %p250 = por %p248, %p249
      %p251 = scmp.ne.s32.totalorder %s243, %s245
      %p252 = scmp.eq.s32.totalorder %s32, 1
      %p253 = por %p251, %p252
      %p254 = scmp.ne.s32.totalorder %s245, %s246
      %p255 = scmp.eq.s32.totalorder %s32, 0
      %p256 = por %p254, %p255
      %p257 = scmp.ne.s32.totalorder %s245, %s246
      %p258 = scmp.eq.s32.totalorder %s33, 1
      %p259 = por %p257, %p258
      %p261 = scmp.ne.s32.totalorder %s246, %s260
      %p262 = scmp.eq.s32.totalorder %s33, 0
      %p263 = por %p261, %p262
      %s264 = ssub.s32 %s35, %s49
      %s265 = ssub.s32 %s36, %s45
      %s266 = sor.u32 %s264, %s265
      %p267 = scmp.eq.s32.totalorder %s266, 0
      %s269 = sadd.s32 %s268, 1
      %s270 = scalar_select %p267, %s268, %s269
      %p273 = pneg %p267
      %p274 = scmp.eq.s32.totalorder %s27, 1
      %p275 = por %p273, %p274
      %p276 = scmp.ne.s32.totalorder %s268, %s271
      %p277 = scmp.eq.s32.totalorder %s27, 0
      %p278 = por %p276, %p277
      %p279 = scmp.ne.s32.totalorder %s268, %s271
      %p280 = scmp.eq.s32.totalorder %s32, 1
      %p281 = por %p279, %p280
      %p282 = scmp.ne.s32.totalorder %s271, %s272
      %p283 = scmp.eq.s32.totalorder %s32, 0
      %p284 = por %p282, %p283
      %p285 = scmp.ne.s32.totalorder %s271, %s272
      %p286 = scmp.eq.s32.totalorder %s33, 1
      %p287 = por %p285, %p286
      %p289 = scmp.ne.s32.totalorder %s272, %s288
      %p290 = scmp.eq.s32.totalorder %s33, 0
      %p291 = por %p289, %p290
      %s292 = ssub.s32 %s34, %s53
      %s293 = ssub.s32 %s35, %s49
      %s294 = sor.u32 %s292, %s293
      %p295 = scmp.eq.s32.totalorder %s294, 0
      %s297 = sadd.s32 %s296, 1
      %s298 = scalar_select %p295, %s296, %s297
      %p301 = pneg %p295
      %p302 = scmp.eq.s32.totalorder %s27, 1
      %p303 = por %p301, %p302
      %p304 = scmp.ne.s32.totalorder %s296, %s299
      %p305 = scmp.eq.s32.totalorder %s27, 0
      %p306 = por %p304, %p305
      %p307 = scmp.ne.s32.totalorder %s296, %s299
      %p308 = scmp.eq.s32.totalorder %s32, 1
      %p309 = por %p307, %p308
      %p310 = scmp.ne.s32.totalorder %s299, %s300
      %p311 = scmp.eq.s32.totalorder %s32, 0
      %p312 = por %p310, %p311
      %p313 = scmp.ne.s32.totalorder %s299, %s300
      %p314 = scmp.eq.s32.totalorder %s33, 1
      %p315 = por %p313, %p314
      %p317 = scmp.ne.s32.totalorder %s300, %s316
      %p318 = scmp.eq.s32.totalorder %s33, 0
      %p319 = por %p317, %p318
      %p320 = scmp.le.s32.totalorder 1, %s27
      %p321 = scmp.lt.s32.totalorder %s27, 3
      %p322 = pnand %p320, %p321
      %p323 = pneg %p322
      // Predicated region
      $region9: #{learnt_attention.1} parent=5 // pred_check
        _
      $region10: #{learnt_attention.1} parent=5 // pred_check_branch
        %325 = sbr.rel (%p322) target = $region12
      $region11: #{learnt_attention.1} parent=5 // pred_region
        %s326 = ssub.s32 %s27, 1
        // Predicated region
        $region13: #{learnt_attention.1} parent=11 // pred_check
          %p327 = pneg %p151
        $region14: #{learnt_attention.1} parent=11 // pred_check_branch
          %329 = sbr.rel (%p327) target = $region16
        $region15: #{learnt_attention.1} parent=11 // pred_region
          %331 = vsyncadd [#allocation13], 0
          %s332 = sshll.u32 %s3, 4
          %s333 = int_to_ptr.hbm [resolvable:$true] %s332
          %s334 = sshll.u32 [#allocation12], 4
          %s335 = int_to_ptr.vmem [resolvable:$true] %s334
          %340 = dma.hbm_to_vmem [thread:$0]  %s333, 512, %s335, [#allocation13], 128, 128, 8
        $region16: #{learnt_attention.1} parent=11 // pred_fallthru
          _
        // Predicated region
        $region17: #{learnt_attention.1} parent=11 // pred_check
          %p341 = pneg %p172
        $region18: #{learnt_attention.1} parent=11 // pred_check_branch
          %343 = sbr.rel (%p341) target = $region20
        $region19: #{learnt_attention.1} parent=11 // pred_region
          %345 = vsyncadd [#allocation13], 0
          %s346 = sshll.u32 %s4, 4
          %s347 = int_to_ptr.hbm [resolvable:$true] %s346
          %s348 = sshll.u32 [#allocation14], 4
          %s349 = int_to_ptr.vmem [resolvable:$true] %s348
          %354 = dma.hbm_to_vmem [thread:$0]  %s347, 512, %s349, [#allocation13], 128, 128, 8
        $region20: #{learnt_attention.1} parent=11 // pred_fallthru
          _
        // Predicated region
        $region21: #{learnt_attention.1} parent=11 // pred_check
          %p355 = pneg %p193
        $region22: #{learnt_attention.1} parent=11 // pred_check_branch
          %357 = sbr.rel (%p355) target = $region24
        $region23: #{learnt_attention.1} parent=11 // pred_region
          %359 = vsyncadd [#allocation16], 0
          %s360 = sshll.u32 %s5, 4
          %s361 = int_to_ptr.hbm [resolvable:$true] %s360
          %s362 = sshll.u32 [#allocation15], 4
          %s363 = int_to_ptr.vmem [resolvable:$true] %s362
          %368 = dma.hbm_to_vmem [thread:$0]  %s361, 512, %s363, [#allocation16], 128, 128, 8
        $region24: #{learnt_attention.1} parent=11 // pred_fallthru
          _
        // Predicated region
        $region25: #{learnt_attention.1} parent=11 // pred_check
          %p369 = pneg %p214
        $region26: #{learnt_attention.1} parent=11 // pred_check_branch
          %371 = sbr.rel (%p369) target = $region28
        $region27: #{learnt_attention.1} parent=11 // pred_region
          _
        $region28: #{learnt_attention.1} parent=11 // pred_fallthru
          _
        // Predicated region
        $region29: #{learnt_attention.1} parent=11 // pred_check
          %p372 = pneg %p235
        $region30: #{learnt_attention.1} parent=11 // pred_check_branch
          %374 = sbr.rel (%p372) target = $region32
        $region31: #{learnt_attention.1} parent=11 // pred_region
          _
        $region32: #{learnt_attention.1} parent=11 // pred_fallthru
          _
        // Predicated region
        $region33: #{learnt_attention.1} parent=11 // pred_check
          %p375 = pneg %p256
        $region34: #{learnt_attention.1} parent=11 // pred_check_branch
          %377 = sbr.rel (%p375) target = $region36
        $region35: #{learnt_attention.1} parent=11 // pred_region
          _
        $region36: #{learnt_attention.1} parent=11 // pred_fallthru
          _
        // Predicated region
        $region37: #{learnt_attention.1} parent=11 // pred_check
          %p378 = pneg %p284
        $region38: #{learnt_attention.1} parent=11 // pred_check_branch
          %380 = sbr.rel (%p378) target = $region40
        $region39: #{learnt_attention.1} parent=11 // pred_region
          %382 = vsyncadd [#allocation16], 0
          %s383 = sadd.s32 %s39, %s38
          %s384 = smul.addr %s383, 8
          %s385 = scalar_lea.hbm %s9, %s384
          %s387 = sshll.u32 %s385, 4
          %s388 = int_to_ptr.hbm [resolvable:$true] %s387
          %s389 = sshll.u32 [#allocation17], 4
          %s390 = int_to_ptr.vmem [resolvable:$true] %s389
          %392 = dma.hbm_to_vmem [thread:$0]  %s388, 128, %s390, [#allocation16]
        $region40: #{learnt_attention.1} parent=11 // pred_fallthru
          _
      $region12: #{learnt_attention.1} parent=5 // pred_fallthru
        _
      %p393 = scmp.lt.s32.totalorder %s27, 2
      // Predicated region
      $region41: #{learnt_attention.1} parent=5 // pred_check
        %p394 = pneg %p393
      $region42: #{learnt_attention.1} parent=5 // pred_check_branch
        %396 = sbr.rel (%p394) target = $region44
      $region43: #{learnt_attention.1} parent=5 // pred_region
        // Predicated region
        $region45: #{learnt_attention.1} parent=43 // pred_check
          %p397 = pneg %p68
        $region46: #{learnt_attention.1} parent=43 // pred_check_branch
          %399 = sbr.rel (%p397) target = $region48
        $region47: #{learnt_attention.1} parent=43 // pred_region
          %s400 = sand.u32 %s58, 1
          %s401 = scalar_lea.sflag [#allocation7], %s400
          %s402 = sand.u32 %s58, 1
          %s403 = smul.addr %s402, 8
          %s404 = scalar_lea.vmem [#allocation6], %s403
          %406 = vsyncadd %s401, 0
          %s407 = sadd.s32 %s35, %s34
          %s408 = smul.addr %s407, 8
          %s409 = scalar_lea.hbm %s0, %s408
          %s411 = sshll.u32 %s409, 4
          %s412 = int_to_ptr.hbm [resolvable:$true] %s411
          %s413 = sshll.u32 %s404, 4
          %s414 = int_to_ptr.vmem [resolvable:$true] %s413
          %416 = dma.hbm_to_vmem [thread:$0]  %s412, 128, %s414, %s401
        $region48: #{learnt_attention.1} parent=43 // pred_fallthru
          _
        // Predicated region
        $region49: #{learnt_attention.1} parent=43 // pred_check
          %p417 = pneg %p96
        $region50: #{learnt_attention.1} parent=43 // pred_check_branch
          %419 = sbr.rel (%p417) target = $region52
        $region51: #{learnt_attention.1} parent=43 // pred_region
          %s420 = sand.u32 %s27, 1
          %s421 = scalar_lea.sflag [#allocation10], %s420
          %s422 = sand.u32 %s86, 1
          %s423 = smul.addr %s422, 8
          %s424 = scalar_lea.vmem [#allocation9], %s423
          %426 = vsyncadd %s421, 0
          %s427 = sadd.s32 %s36, %s34
          %s428 = smul.addr %s427, 8
          %s429 = scalar_lea.hbm %s1, %s428
          %s431 = sshll.u32 %s429, 4
          %s432 = int_to_ptr.hbm [resolvable:$true] %s431
          %s433 = sshll.u32 %s424, 4
          %s434 = int_to_ptr.vmem [resolvable:$true] %s433
          %436 = dma.hbm_to_vmem [thread:$0]  %s432, 128, %s434, %s421
        $region52: #{learnt_attention.1} parent=43 // pred_fallthru
          _
        // Predicated region
        $region53: #{learnt_attention.1} parent=43 // pred_check
          %p437 = pneg %p124
        $region54: #{learnt_attention.1} parent=43 // pred_check_branch
          %439 = sbr.rel (%p437) target = $region56
        $region55: #{learnt_attention.1} parent=43 // pred_region
          %s440 = sand.u32 %s27, 1
          %s441 = scalar_lea.sflag [#allocation10], %s440
          %s442 = sand.u32 %s114, 1
          %s443 = smul.addr %s442, 8
          %s444 = scalar_lea.vmem [#allocation11], %s443
          %446 = vsyncadd %s441, 0
          %s447 = sadd.s32 %s36, %s34
          %s448 = smul.addr %s447, 8
          %s449 = scalar_lea.hbm %s2, %s448
          %s451 = sshll.u32 %s449, 4
          %s452 = int_to_ptr.hbm [resolvable:$true] %s451
          %s453 = sshll.u32 %s444, 4
          %s454 = int_to_ptr.vmem [resolvable:$true] %s453
          %456 = dma.hbm_to_vmem [thread:$0]  %s452, 128, %s454, %s441
        $region56: #{learnt_attention.1} parent=43 // pred_fallthru
          _
      $region44: #{learnt_attention.1} parent=5 // pred_fallthru
        _
      %p457 = scmp.le.s32.totalorder 1, %s27
      %p458 = scmp.lt.s32.totalorder %s27, 3
      %p459 = pnand %p457, %p458
      %p460 = pneg %p459
      // Predicated region
      $region57: #{learnt_attention.1} parent=5 // pred_check
        _
      $region58: #{learnt_attention.1} parent=5 // pred_check_branch
        %462 = sbr.rel (%p459) target = $region60
      $region59: #{learnt_attention.1} parent=5 // pred_region
        %s463 = ssub.s32 %s27, 1
        %s464 = sand.u32 %s61, 1
        %s465 = scalar_lea.sflag [#allocation7], %s464
        %s466 = sand.u32 %s61, 1
        %s467 = smul.addr %s466, 8
        %s468 = scalar_lea.vmem [#allocation6], %s467
        // Predicated region
        $region61: #{learnt_attention.1} parent=59 // pred_check
          %p469 = pneg %p74
        $region62: #{learnt_attention.1} parent=59 // pred_check_branch
          %471 = sbr.rel (%p469) target = $region64
        $region63: #{learnt_attention.1} parent=59 // pred_region
          %473 = dma.done %s465, 128
        $region64: #{learnt_attention.1} parent=59 // pred_fallthru
          _
        %s474 = sand.u32 %s32, 1
        %s475 = scalar_lea.sflag [#allocation10], %s474
        %s476 = sand.u32 %s89, 1
        %s477 = smul.addr %s476, 8
        %s478 = scalar_lea.vmem [#allocation9], %s477
        // Predicated region
        $region65: #{learnt_attention.1} parent=59 // pred_check
          %p479 = pneg %p102
        $region66: #{learnt_attention.1} parent=59 // pred_check_branch
          %481 = sbr.rel (%p479) target = $region68
        $region67: #{learnt_attention.1} parent=59 // pred_region
          %483 = dma.done %s475, 128
        $region68: #{learnt_attention.1} parent=59 // pred_fallthru
          _
        %s484 = sand.u32 %s32, 1
        %s485 = scalar_lea.sflag [#allocation10], %s484
        %s486 = sand.u32 %s117, 1
        %s487 = smul.addr %s486, 8
        %s488 = scalar_lea.vmem [#allocation11], %s487
        // Predicated region
        $region69: #{learnt_attention.1} parent=59 // pred_check
          %p489 = pneg %p130
        $region70: #{learnt_attention.1} parent=59 // pred_check_branch
          %491 = sbr.rel (%p489) target = $region72
        $region71: #{learnt_attention.1} parent=59 // pred_region
          %493 = dma.done %s485, 128
        $region72: #{learnt_attention.1} parent=59 // pred_fallthru
          _
        // Predicated region
        $region73: #{learnt_attention.1} parent=59 // pred_check
          %p494 = pneg %p151
        $region74: #{learnt_attention.1} parent=59 // pred_check_branch
          %496 = sbr.rel (%p494) target = $region76
        $region75: #{learnt_attention.1} parent=59 // pred_region
          %498 = dma.done [#allocation13], 512
        $region76: #{learnt_attention.1} parent=59 // pred_fallthru
          _
        // Predicated region
        $region77: #{learnt_attention.1} parent=59 // pred_check
          %p499 = pneg %p172
        $region78: #{learnt_attention.1} parent=59 // pred_check_branch
          %501 = sbr.rel (%p499) target = $region80
        $region79: #{learnt_attention.1} parent=59 // pred_region
          %503 = dma.done [#allocation13], 512
        $region80: #{learnt_attention.1} parent=59 // pred_fallthru
          _
        // Predicated region
        $region81: #{learnt_attention.1} parent=59 // pred_check
          %p504 = pneg %p193
        $region82: #{learnt_attention.1} parent=59 // pred_check_branch
          %506 = sbr.rel (%p504) target = $region84
        $region83: #{learnt_attention.1} parent=59 // pred_region
          %508 = dma.done [#allocation16], 512
        $region84: #{learnt_attention.1} parent=59 // pred_fallthru
          _
        // Predicated region
        $region85: #{learnt_attention.1} parent=59 // pred_check
          %p509 = pneg %p284
        $region86: #{learnt_attention.1} parent=59 // pred_check_branch
          %511 = sbr.rel (%p509) target = $region88
        $region87: #{learnt_attention.1} parent=59 // pred_region
          %513 = dma.done [#allocation16], 128
        $region88: #{learnt_attention.1} parent=59 // pred_fallthru
          _
        %s514 = sand.u32 %s61, 1
        %s515 = scalar_lea.sflag [#allocation7], %s514
        %s516 = sand.u32 %s61, 1
        %s517 = smul.addr %s516, 8
        %s518 = scalar_lea.vmem [#allocation6], %s517
        %p519 = pneg %p74
        %p520 = pneg %p71
        %s521 = sand.u32 %s32, 1
        %s522 = scalar_lea.sflag [#allocation10], %s521
        %s523 = sand.u32 %s89, 1
        %s524 = smul.addr %s523, 8
        %s525 = scalar_lea.vmem [#allocation9], %s524
        %p526 = pneg %p102
        %p527 = pneg %p99
        %s528 = sand.u32 %s32, 1
        %s529 = scalar_lea.sflag [#allocation10], %s528
        %s530 = sand.u32 %s117, 1
        %s531 = smul.addr %s530, 8
        %s532 = scalar_lea.vmem [#allocation11], %s531
        %p533 = pneg %p130
        %p534 = pneg %p127
        %p535 = pneg %p151
        %p536 = pneg %p148
        %p537 = pneg %p172
        %p538 = pneg %p169
        %p539 = pneg %p193
        %p540 = pneg %p190
        %p541 = pneg %p214
        %p542 = pneg %p211
        %p543 = pneg %p235
        %p544 = pneg %p232
        %p545 = pneg %p256
        %p546 = pneg %p253
        %p547 = pneg %p284
        %p548 = pneg %p281
        %p549 = pneg %p312
        %p550 = pneg %p309
        %s551 = sand.u32 %s299, 1
        %s552 = scalar_lea.sflag [#allocation8], %s551
        %s553 = sand.u32 %s299, 1
        %s554 = smul.addr %s553, 8
        %s555 = scalar_lea.vmem [#allocation18], %s554
        %p556 = scmp.eq.s32.totalorder %s39, 0
        // Predicated region
        $region89: #{learnt_attention.1} parent=59 // pred_check
          %p557 = pneg %p556
        $region90: #{learnt_attention.1} parent=59 // pred_check_branch
          %559 = sbr.rel (%p557) target = $region92
        $region91: #{learnt_attention.1} parent=59 // pred_region
          %v560 = vld [vmem:[%s468] sm:$0xff]
          %v561 = vld [vmem:[#allocation12] sm:$0xff]
          %v562 = vld [vmem:[#allocation12 + $0x8] sm:$0xff]
          %v563 = vld [vmem:[#allocation12 + $0x10] sm:$0xff]
          %v564 = vld [vmem:[#allocation12 + $0x18] sm:$0xff]
          %v565 = vld [vmem:[%s6] sm:$0x1]
          %v567 = vperm.slane %v565, 0
          %vm569 = vcmask 261120
          %v571 = vsel %vm569, %v560, 0
          %573 = vmatpush.msra.mxu0 0.0
          %574 = vmatpush.msra.mxu0 0.0
          %575 = vmatpush.msra.mxu0 0.0
          %576 = vmatpush.msra.mxu0 0.0
          %577 = vmatpush.msra.mxu0 0.0
          %578 = vmatpush.msra.mxu0 0.0
          %579 = vmatpush.msra.mxu0 0.0
          %580 = vmatpush.msra.mxu0 0.0
          %581 = vmatpush.msra.mxu0 0.0
          %582 = vmatpush.msra.mxu0 0.0
          %583 = vmatpush.msra.mxu0 0.0
          %584 = vmatpush.msra.mxu0 0.0
          %585 = vmatpush.msra.mxu0 %v564
          %586 = vmatpush.msra.mxu0 %v563
          %587 = vmatpush.msra.mxu0 %v562
          %588 = vmatpush.msra.mxu0 %v561
          %589 = vmatmul.f32.gmra.mxu0 %v571
          %v590 = vpop.f32.mrf.mxu0
          %v591 = vadd.f32 %v567, %v590
          %592 = vdwg.mxu0
          %v593 = vmul.f32 %v591, 0.17677669
          %594 = vst.msk [vmem:[#allocation2] sm:$0xff] %vm569, %v593
          %vm595 = vcmask 7168
          %596 = vst.msk [vmem:[#allocation3] sm:$0xff] %vm595, -inf
          %597 = vst.msk [vmem:[#allocation4] sm:$0xff] %vm595, 0.0
          %598 = vst.msk [vmem:[#allocation5] sm:$0xff] %vm569, 0.0
        $region92: #{learnt_attention.1} parent=59 // pred_fallthru
          _
        %v599 = vld [vmem:[%s478] sm:$0xff]
        %v600 = vld [vmem:[#allocation14] sm:$0xff]
        %v601 = vld [vmem:[#allocation14 + $0x8] sm:$0xff]
        %v602 = vld [vmem:[#allocation14 + $0x10] sm:$0xff]
        %v603 = vld [vmem:[#allocation14 + $0x18] sm:$0xff]
        %v604 = vld [vmem:[%s7] sm:$0x1]
        %v606 = vperm.slane %v604, 0
        %vm608 = vcmask 261120
        %v610 = vsel %vm608, %v599, 0
        %612 = vmatpush.msra.mxu0 0.0
        %613 = vmatpush.msra.mxu0 0.0
        %614 = vmatpush.msra.mxu0 0.0
        %615 = vmatpush.msra.mxu0 0.0
        %616 = vmatpush.msra.mxu0 0.0
        %617 = vmatpush.msra.mxu0 0.0
        %618 = vmatpush.msra.mxu0 0.0
        %619 = vmatpush.msra.mxu0 0.0
        %620 = vmatpush.msra.mxu0 0.0
        %621 = vmatpush.msra.mxu0 0.0
        %622 = vmatpush.msra.mxu0 0.0
        %623 = vmatpush.msra.mxu0 0.0
        %624 = vmatpush.msra.mxu0 %v603
        %625 = vmatpush.msra.mxu0 %v602
        %626 = vmatpush.msra.mxu0 %v601
        %627 = vmatpush.msra.mxu0 %v600
        %628 = vmatmul.f32.gmra.mxu0 %v610
        %v629 = vpop.f32.mrf.mxu0
        %v630 = vadd.f32 %v606, %v629
        %631 = vdwg.mxu0
        %v632 = vld [vmem:[%s488] sm:$0xff]
        %v633 = vld [vmem:[#allocation15] sm:$0xff]
        %v634 = vld [vmem:[#allocation15 + $0x8] sm:$0xff]
        %v635 = vld [vmem:[#allocation15 + $0x10] sm:$0xff]
        %v636 = vld [vmem:[#allocation15 + $0x18] sm:$0xff]
        %v637 = vld [vmem:[%s8] sm:$0x1]
        %v639 = vperm.slane %v637, 0
        %v642 = vsel %vm608, %v632, 0
        %644 = vmatpush.msra.mxu0 0.0
        %645 = vmatpush.msra.mxu0 0.0
        %646 = vmatpush.msra.mxu0 0.0
        %647 = vmatpush.msra.mxu0 0.0
        %648 = vmatpush.msra.mxu0 0.0
        %649 = vmatpush.msra.mxu0 0.0
        %650 = vmatpush.msra.mxu0 0.0
        %651 = vmatpush.msra.mxu0 0.0
        %652 = vmatpush.msra.mxu0 0.0
        %653 = vmatpush.msra.mxu0 0.0
        %654 = vmatpush.msra.mxu0 0.0
        %655 = vmatpush.msra.mxu0 0.0
        %656 = vmatpush.msra.mxu0 %v636
        %657 = vmatpush.msra.mxu0 %v635
        %658 = vmatpush.msra.mxu0 %v634
        %659 = vmatpush.msra.mxu0 %v633
        %660 = vmatmul.f32.gmra.mxu0 %v642
        %v661 = vpop.f32.mrf.mxu0
        %v662 = vadd.f32 %v639, %v661
        %663 = vdwg.mxu0
        %v664 = vld [vmem:[#allocation2] sm:$0xff]
        %v666 = vsel %vm608, %v664, 0
        %v669 = vsel %vm608, %v630, 0
        %671 = vmatpush.xpose.msra.mxu0 0.0
        %672 = vmatpush.xpose.msra.mxu0 0.0
        %673 = vmatpush.xpose.msra.mxu0 0.0
        %674 = vmatpush.xpose.msra.mxu0 0.0
        %675 = vmatpush.xpose.msra.mxu0 0.0
        %676 = vmatpush.xpose.msra.mxu0 0.0
        %677 = vmatpush.xpose.msra.mxu0 0.0
        %678 = vmatpush.xpose.msra.mxu0 0.0
        %679 = vmatpush.xpose.msra.mxu0 0.0
        %680 = vmatpush.xpose.msra.mxu0 0.0
        %681 = vmatpush.xpose.msra.mxu0 0.0
        %682 = vmatpush.xpose.msra.mxu0 0.0
        %683 = vmatpush.xpose.msra.mxu0 0.0
        %684 = vmatpush.xpose.msra.mxu0 0.0
        %685 = vmatpush.xpose.msra.mxu0 0.0
        %686 = vmatpush.xpose.msra.mxu0 %v669
        %687 = vmatmul.f32.gmra.mxu0 %v666
        %v688 = vpop.f32.mrf.mxu0
        %v689 = vadd.f32 0.0, %v688
        %690 = vdwg.mxu0
        %v691 = vld [vmem:[#allocation3] sm:$0xff]
        %vm692 = vcmask 64512
        %v693 = vsel %vm692, %v689, -inf
        %694 = vmax.xlane.f32.xlu0 %v693
        %v695 = vpop.xlane.xlu0 %694
        %v696 = vmax.f32 %v691, %v695
        %v697 = vsub.f32 %v691, %v696
        %v698 = vmul.f32 %v697, 1.442695
        %v699 = vpow.pop %v698
        %701 = vset.pattern.permute.xlu0 0
        %702 = vperm.xlu0 %701, %v696
        %v703 = vpop.permute.xlu0 %702
        %v705 = vsub.f32 %v689, %v703
        %v706 = vmul.f32 %v705, 1.442695
        %v707 = vpow.pop %v706
        %v708 = vld [vmem:[#allocation4] sm:$0xff]
        %v709 = vmul.f32 %v699, %v708
        %v710 = vsel %vm692, %v707, 0.0
        %711 = vadd.xlane.f32.xlu0 %v710
        %v712 = vpop.xlane.xlu0 %711
        %v713 = vadd.f32 %v709, %v712
        %vm714 = vcmask 7168
        %715 = vst.msk [vmem:[#allocation4] sm:$0xff] %vm714, %v713
        %v716 = vld [vmem:[#allocation17] sm:$0xff]
        %v717 = vmul.f32 %v707, %v716
        %v718 = vld [vmem:[#allocation5] sm:$0xff]
        %720 = vset.pattern.permute.xlu0 0
        %721 = vperm.xlu0 %720, %v699
        %v722 = vpop.permute.xlu0 %721
        %v724 = vmul.f32 %v722, %v718
        %v726 = vsel %vm692, %v717, 0
        %728 = vmatpush.msra.mxu0 0.0
        %729 = vmatpush.msra.mxu0 0.0
        %730 = vmatpush.msra.mxu0 0.0
        %731 = vmatpush.msra.mxu0 0.0
        %732 = vmatpush.msra.mxu0 0.0
        %733 = vmatpush.msra.mxu0 0.0
        %734 = vmatpush.msra.mxu0 0.0
        %735 = vmatpush.msra.mxu0 0.0
        %736 = vmatpush.msra.mxu0 0.0
        %737 = vmatpush.msra.mxu0 0.0
        %738 = vmatpush.msra.mxu0 0.0
        %739 = vmatpush.msra.mxu0 0.0
        %740 = vmatpush.msra.mxu0 0.0
        %741 = vmatpush.msra.mxu0 0.0
        %742 = vmatpush.msra.mxu0 0.0
        %743 = vmatpush.msra.mxu0 %v662
        %744 = vmatmul.f32.gmra.mxu0 %v726
        %v745 = vpop.f32.mrf.mxu0
        %v746 = vadd.f32 0.0, %v745
        %747 = vdwg.mxu0
        %v748 = vadd.f32 %v724, %v746
        %749 = vst.msk [vmem:[#allocation5] sm:$0xff] %vm608, %v748
        %750 = vst.msk [vmem:[#allocation3] sm:$0xff] %vm714, %v696
        // Predicated region
        $region93: #{learnt_attention.1} parent=59 // pred_check
          %p751 = pneg %p556
        $region94: #{learnt_attention.1} parent=59 // pred_check_branch
          %753 = sbr.rel (%p751) target = $region96
        $region95: #{learnt_attention.1} parent=59 // pred_region
          %v754 = vld [vmem:[#allocation4] sm:$0xff]
          %v755 = vrcp.pop %v754
          %v756 = vld [vmem:[#allocation5] sm:$0xff]
          %758 = vset.pattern.permute.xlu0 0
          %759 = vperm.xlu0 %758, %v755
          %v760 = vpop.permute.xlu0 %759
          %v762 = vmul.f32 %v756, %v760
          %763 = vst.msk [vmem:[%s555] sm:$0xff] %vm608, %v762
        $region96: #{learnt_attention.1} parent=59 // pred_fallthru
          _
        %s764 = sand.u32 %s299, 1
        %s765 = scalar_lea.sflag [#allocation8], %s764
        %s766 = sand.u32 %s299, 1
        %s767 = smul.addr %s766, 8
        %s768 = scalar_lea.vmem [#allocation18], %s767
        // Predicated region
        $region97: #{learnt_attention.1} parent=59 // pred_check
          %p769 = pneg %p309
        $region98: #{learnt_attention.1} parent=59 // pred_check_branch
          %771 = sbr.rel (%p769) target = $region100
        $region99: #{learnt_attention.1} parent=59 // pred_region
          %773 = vsyncadd %s765, 0
          %s774 = sadd.s32 %s38, %s37
          %s775 = smul.addr %s774, 8
          %s776 = scalar_lea.hbm %s10, %s775
          %s778 = sshll.u32 %s768, 4
          %s779 = int_to_ptr.vmem [resolvable:$true] %s778
          %s780 = sshll.u32 %s776, 4
          %s781 = int_to_ptr.hbm [resolvable:$true] %s780
          %783 = dma.vmem_to_hbm [thread:$0]  %s779, 128, %s781, %s765
        $region100: #{learnt_attention.1} parent=59 // pred_fallthru
          _
      $region60: #{learnt_attention.1} parent=5 // pred_fallthru
        _
      %p784 = scmp.le.s32.totalorder 2, %s27
      // Predicated region
      $region101: #{learnt_attention.1} parent=5 // pred_check
        %p785 = pneg %p784
      $region102: #{learnt_attention.1} parent=5 // pred_check_branch
        %787 = sbr.rel (%p785) target = $region104
      $region103: #{learnt_attention.1} parent=5 // pred_region
        %s788 = ssub.s32 %s27, 2
        // Predicated region
        $region105: #{learnt_attention.1} parent=103 // pred_check
          %p789 = pneg %p315
        $region106: #{learnt_attention.1} parent=103 // pred_check_branch
          %791 = sbr.rel (%p789) target = $region108
        $region107: #{learnt_attention.1} parent=103 // pred_region
          %s792 = sand.u32 %s300, 1
          %s793 = scalar_lea.sflag [#allocation8], %s792
          %s794 = sand.u32 %s300, 1
          %s795 = smul.addr %s794, 8
          %s796 = scalar_lea.vmem [#allocation18], %s795
          %798 = dma.done %s793, 128
        $region108: #{learnt_attention.1} parent=103 // pred_fallthru
          _
      $region104: #{learnt_attention.1} parent=5 // pred_fallthru
        _
    $region6: #{learnt_attention.1} parent=1 // loop_footer
      %s31 = sadd.s32 1, %s27
    $region7: #{learnt_attention.1} parent=1 // loop_footer_branch
      %26 = sbr.rel target = $region3
    $region8: #{learnt_attention.1} parent=1 // loop_exit
      _
    %799 = vsyncpa [#allocation7], 1
    %s800 = scalar_lea.sflag [#allocation7], 1
    %801 = vsyncpa %s800, 1
    %802 = vsyncpa [#allocation10], 1
    %s803 = scalar_lea.sflag [#allocation10], 1
    %804 = vsyncpa %s803, 1
    %805 = vsyncpa [#allocation13], 1
    %806 = vsyncpa [#allocation16], 1
    %807 = vsyncpa [#allocation8], 1
    %s808 = scalar_lea.sflag [#allocation8], 1
    %809 = vsyncpa %s808, 1

</llo_original>
